<compile_context>
chip_gen: v7x
topology: tpu7x:2x2x1
jax: 0.10.0
libtpu: 0.0.40
codegen_flags: <defaults>
</compile_context>

<pallas_src>
import jax
import jax.numpy as jnp
from jax import lax
from jax.experimental import pallas as pl
from jax.experimental.pallas import tpu as pltpu


# ----------------------------------------------------------------------------
# Kernel: fused (im2col'd) conv matmul + ReLU on one (batch, spatial-tile).
# ----------------------------------------------------------------------------
def conv_relu_kernel(p_ref, w_ref, o_ref):
    # p_ref: (1, K, TN)   im2col patches, tap-major / channel-minor along K
    # w_ref: (Cout, K)    reshaped conv weight
    # o_ref: (1, Cout, TN) output tile, lane-dense along TN (= spatial)
    acc = jnp.dot(w_ref[...], p_ref[0], preferred_element_type=jnp.float32)
    o_ref[0] = jnp.maximum(acc, 0.0).astype(o_ref.dtype)


def _pick_spatial_tile(n):
    """Largest divisor of n that is a multiple of 128 and <= 2048, else n."""
    for t in (2048, 1024, 512, 256, 128):
        if n % t == 0:
            return t
    return n


# ----------------------------------------------------------------------------
# Wrapper: layout plumbing (reflection pad + im2col) in plain JAX, conv+ReLU
# in the Pallas kernel. Input/output are NCHW to match the PyTorch module.
# ----------------------------------------------------------------------------
def output_block(x, weight):
    """Forward of _OutputBlock. x: (B, Cin, H, W) f32, weight: (Cout, Cin, k, k)."""
    B, Cin, H, W = x.shape
    Cout, _, k, _ = weight.shape
    pad = k // 2
    N = H * W
    K = k * k * Cin

    # ReflectionPad2d(pad)
    xp = jnp.pad(x, ((0, 0), (0, 0), (pad, pad), (pad, pad)), mode="reflect")

    # im2col outside the kernel: stack the k*k shifted views -> (B, K, H*W).
    taps = [xp[:, :, kh:kh + H, kw:kw + W]
            for kh in range(k) for kw in range(k)]            # each (B, Cin, H, W)
    patches = jnp.stack(taps, axis=1).reshape(B, K, N)

    # PyTorch weight (Cout, Cin, kh, kw) -> (Cout, kh, kw, Cin) -> (Cout, K)
    # to match the tap-major / channel-minor ordering of `patches`.
    w_mat = jnp.transpose(weight, (0, 2, 3, 1)).reshape(Cout, K)

    TN = _pick_spatial_tile(N)
    grid = (B, N // TN)

    out = pl.pallas_call(
        conv_relu_kernel,
        out_shape=jax.ShapeDtypeStruct((B, Cout, N), jnp.float32),
        grid=grid,
        in_specs=[
            pl.BlockSpec((1, K, TN), lambda b, n: (b, 0, n)),
            pl.BlockSpec((Cout, K), lambda b, n: (0, 0)),
        ],
        out_specs=pl.BlockSpec((1, Cout, TN), lambda b, n: (b, 0, n)),
        compiler_params=pltpu.CompilerParams(
            dimension_semantics=("parallel", "parallel")),
    )(patches, w_mat)

    return out.reshape(B, Cout, H, W)


# ----------------------------------------------------------------------------
# Pure-JAX reference (same semantics) for a correctness check.
# ----------------------------------------------------------------------------
def _reference(x, weight):
    pad = weight.shape[2] // 2
    xp = jnp.pad(x, ((0, 0), (0, 0), (pad, pad), (pad, pad)), mode="reflect")
    y = lax.conv_general_dilated(
        xp, weight, window_strides=(1, 1), padding="VALID",
        dimension_numbers=("NCHW", "OIHW", "NCHW"))
    return jnp.maximum(y, 0.0)


# ----------------------------------------------------------------------------
# Deterministic smoke test.
# ----------------------------------------------------------------------------
if __name__ == "__main__":
    B, input_nc, output_nc, H, W = 2, 4, 4, 16, 16
    kernel_size = 3

    key = jax.random.PRNGKey(0)
    k_x, k_w = jax.random.split(key, 2)

    x = jax.random.normal(k_x, (B, input_nc, H, W), jnp.float32)
    # Conv2d(input_nc, output_nc, 3, padding=0, bias=False): (Cout, Cin, 3, 3)
    weight = jax.random.normal(
        k_w, (output_nc, input_nc, kernel_size, kernel_size), jnp.float32) * 0.1

    fwd = jax.jit(output_block)
    y = fwd(x, weight)
    jax.block_until_ready(y)

    assert y.shape == (B, output_nc, H, W), y.shape
    assert y.dtype == jnp.float32
    assert bool(jnp.all(jnp.isfinite(y)))

    y_ref = _reference(x, weight)
    assert bool(jnp.allclose(y, y_ref, rtol=1e-4, atol=1e-4)), \
        float(jnp.max(jnp.abs(y - y_ref)))

    print("KERNEL_OK")
</pallas_src>

<mosaic_0001>
module attributes {stable_mosaic.version = 11 : i64} {
  func.func @conv_relu_kernel(%arg0: i32, %arg1: i32, %arg2: memref<1x36x256xf32, #tpu.memory_space<vmem>>, %arg3: memref<4x36xf32, #tpu.memory_space<vmem>>, %arg4: memref<1x4x256xf32, #tpu.memory_space<vmem>>) attributes {dimension_semantics = [#tpu.dimension_semantics<parallel>, #tpu.dimension_semantics<parallel>], iteration_bounds = array<i64: 2, 1>, scalar_prefetch = 0 : i64, scratch_operands = 0 : i64, tpu.core_type = #tpu.core_type<tc>, window_params = [{transform_indices = @transform_0, window_bounds = array<i64: 1, 36, 256>}, {pipeline_mode = #tpu.pipeline_mode<synchronous>, transform_indices = @transform_1, window_bounds = array<i64: 4, 36>}, {transform_indices = @transform_2, window_bounds = array<i64: 1, 4, 256>}]} {
    %c0 = arith.constant 0 : index
    %c0_0 = arith.constant 0 : index
    %0 = vector.load %arg3[%c0, %c0_0] : memref<4x36xf32, #tpu.memory_space<vmem>>, vector<4x36xf32>
    %c0_1 = arith.constant 0 : index
    %c0_2 = arith.constant 0 : index
    %c0_3 = arith.constant 0 : index
    %1 = vector.load %arg2[%c0_1, %c0_2, %c0_3] : memref<1x36x256xf32, #tpu.memory_space<vmem>>, vector<1x36x256xf32>
    %2 = vector.shape_cast %1 : vector<1x36x256xf32> to vector<36x256xf32>
    %cst = arith.constant dense<0.000000e+00> : vector<4x256xf32>
    %3 = tpu.matmul %0, %2, %cst {dimension_numbers = #tpu.dot_dimension_numbers<[1], [0], [0], [1], [0, 0, 1, 1], [], []>} : vector<4x36xf32>, vector<36x256xf32>, vector<4x256xf32> -> vector<4x256xf32>
    %cst_4 = arith.constant 0.000000e+00 : f32
    %4 = vector.broadcast %cst_4 : f32 to vector<4x256xf32>
    %5 = arith.maximumf %3, %4 : vector<4x256xf32>
    %c0_5 = arith.constant 0 : index
    %c0_6 = arith.constant 0 : index
    %c0_7 = arith.constant 0 : index
    %6 = vector.load %arg4[%c0_5, %c0_6, %c0_7] : memref<1x4x256xf32, #tpu.memory_space<vmem>>, vector<1x4x256xf32>
    %7 = vector.shape_cast %6 : vector<1x4x256xf32> to vector<4x256xf32>
    %8 = vector.shape_cast %5 : vector<4x256xf32> to vector<1x4x256xf32>
    tpu.vector_store %arg4[%c0_5, %c0_6, %c0_7], %8 {strides = array<i32>} : memref<1x4x256xf32, #tpu.memory_space<vmem>>, vector<1x4x256xf32>,
    return
  }
  func.func @transform_0(%arg0: i32, %arg1: i32) -> (i32, i32, i32) {
    %c0_i32 = arith.constant 0 : i32
    %c0_i32_0 = arith.constant 0 : i32
    return %arg0, %c0_i32, %arg1 : i32, i32, i32
  }
  func.func @transform_1(%arg0: i32, %arg1: i32) -> (i32, i32) {
    %c0_i32 = arith.constant 0 : i32
    %c0_i32_0 = arith.constant 0 : i32
    %c0_i32_1 = arith.constant 0 : i32
    return %c0_i32, %c0_i32_0 : i32, i32
  }
  func.func @transform_2(%arg0: i32, %arg1: i32) -> (i32, i32, i32) {
    %c0_i32 = arith.constant 0 : i32
    %c0_i32_0 = arith.constant 0 : i32
    return %arg0, %c0_i32, %arg1 : i32, i32, i32
  }
}

</mosaic_0001>

<llo_original>
// kernel: output_block.1
$region0: #{output_block.1}
  #allocation0 [shape = 'u32[]', space=smem, size = 0x4, offset = 0x4, fixed_abs, tag = 'smem constant byte address 0x4 - core index']
  #allocation1 [shape = 'u32[144,128]{1,0:T(1,128)}', space=vmem, size = 0x12000, scoped, tag = 'internal scratch']
  %s0 = inlined_call_operand.vmem [shape: f32[2,36,256], index: 0, kind: input, shape index: {}]
  %s1 = inlined_call_operand.vmem [shape: f32[4,36], index: 1, kind: input, shape index: {}]
  %s2 = inlined_call_operand.vmem [shape: f32[2,4,256], index: 2, kind: output, shape index: {}]
  %s3 = sld [smem:[#allocation0]]
  $region41: #{output_block.1} parent=0
    _
  %s5 = ssub.s32 1, %s3
  %s6 = scalar_select 0, %s5, %s3
  loop: start=0, step=1, limit=4
  $region2: #{output_block.1} parent=0 // loop_pre_header
    _
  $region3: #{output_block.1} parent=0 // loop_header
    %s8 = sphi 0, %s12
    %p9 = scmp.ge.s32.totalorder %s8, 4
    %s15 = sphi 0, %s27
    %s16 = sphi 0, %s23
    %s17 = sphi 0, %s15
    %s18 = sphi 0, %s16
    %s19 = sphi 0, %s17
    %s20 = sphi 0, %s18
    %s32 = sphi 0, %s34
    %s35 = sphi 0, %s32
    %s36 = sphi 0, %s35
    %s52 = sphi 0, %s36
    %s56 = sphi 0, %s56
    %s58 = sphi 0, %s56
    %s59 = sphi 0, %s58
    %s73 = sphi 0, %s59
    %s81 = sphi 0, %s83
    %s84 = sphi 0, %s81
    %s85 = sphi 0, %s84
    %s101 = sphi 0, %s85
  $region4: #{output_block.1} parent=0 // loop_header_branch
    %11 = sbr.rel (%p9) target = $region8
  $region5: #{output_block.1} parent=0 // loop_body
    %s13 = ssub.s32 %s8, 1
    %s14 = ssub.s32 %s8, 2
    %s21 = sadd.s32 1, %s16
    %p22 = scmp.ge.s32.totalorder %s21, 1
    %s23 = scalar_select %p22, 0, %s21
    %s24 = sadd.s32 1, %s15
    %s25 = scalar_select %p22, %s24, %s15
    %p26 = scmp.ge.s32.totalorder %s25, 2
    %s27 = scalar_select %p26, 0, %s25
    %s28 = ssub.s32 %s15, %s27
    %s29 = ssub.s32 %s16, %s23
    %s30 = sor.u32 %s28, %s29
    %p31 = scmp.eq.s32.totalorder %s30, 0
    %s33 = sadd.s32 %s32, 1
    %s34 = scalar_select %p31, %s32, %s33
    %p37 = pneg %p31
    %p38 = scmp.eq.s32.totalorder %s8, 1
    %p39 = por %p37, %p38
    %p40 = scmp.ne.s32.totalorder %s32, %s35
    %p41 = scmp.eq.s32.totalorder %s8, 0
    %p42 = por %p40, %p41
    %p43 = scmp.ne.s32.totalorder %s32, %s35
    %p44 = scmp.eq.s32.totalorder %s13, 1
    %p45 = por %p43, %p44
    %p46 = scmp.ne.s32.totalorder %s35, %s36
    %p47 = scmp.eq.s32.totalorder %s13, 0
    %p48 = por %p46, %p47
    %p49 = scmp.ne.s32.totalorder %s35, %s36
    %p50 = scmp.eq.s32.totalorder %s14, 1
    %p51 = por %p49, %p50
    %p53 = scmp.ne.s32.totalorder %s36, %s52
    %p54 = scmp.eq.s32.totalorder %s14, 0
    %p55 = por %p53, %p54
    %s57 = sadd.s32 %s56, 1
    %p60 = scmp.eq.s32.totalorder %s8, 1
    %p61 = scmp.ne.s32.totalorder %s56, %s58
    %p62 = scmp.eq.s32.totalorder %s8, 0
    %p63 = por %p61, %p62
    %p64 = scmp.ne.s32.totalorder %s56, %s58
    %p65 = scmp.eq.s32.totalorder %s13, 1
    %p66 = por %p64, %p65
    %p67 = scmp.ne.s32.totalorder %s58, %s59
    %p68 = scmp.eq.s32.totalorder %s13, 0
    %p69 = por %p67, %p68
    %p70 = scmp.ne.s32.totalorder %s58, %s59
    %p71 = scmp.eq.s32.totalorder %s14, 1
    %p72 = por %p70, %p71
    %p74 = scmp.ne.s32.totalorder %s59, %s73
    %p75 = scmp.eq.s32.totalorder %s14, 0
    %p76 = por %p74, %p75
    %s77 = ssub.s32 %s15, %s27
    %s78 = ssub.s32 %s16, %s23
    %s79 = sor.u32 %s77, %s78
    %p80 = scmp.eq.s32.totalorder %s79, 0
    %s82 = sadd.s32 %s81, 1
    %s83 = scalar_select %p80, %s81, %s82
    %p86 = pneg %p80
    %p87 = scmp.eq.s32.totalorder %s8, 1
    %p88 = por %p86, %p87
    %p89 = scmp.ne.s32.totalorder %s81, %s84
    %p90 = scmp.eq.s32.totalorder %s8, 0
    %p91 = por %p89, %p90
    %p92 = scmp.ne.s32.totalorder %s81, %s84
    %p93 = scmp.eq.s32.totalorder %s13, 1
    %p94 = por %p92, %p93
    %p95 = scmp.ne.s32.totalorder %s84, %s85
    %p96 = scmp.eq.s32.totalorder %s13, 0
    %p97 = por %p95, %p96
    %p98 = scmp.ne.s32.totalorder %s84, %s85
    %p99 = scmp.eq.s32.totalorder %s14, 1
    %p100 = por %p98, %p99
    %p102 = scmp.ne.s32.totalorder %s85, %s101
    %p103 = scmp.eq.s32.totalorder %s14, 0
    %p104 = por %p102, %p103
    %p105 = scmp.le.s32.totalorder 1, %s8
    %p106 = scmp.lt.s32.totalorder %s8, 3
    %p107 = pnand %p105, %p106
    %p108 = pneg %p107
    // Predicated region
    $region9: #{output_block.1} parent=5 // pred_check
      _
    $region10: #{output_block.1} parent=5 // pred_check_branch
      %110 = sbr.rel (%p107) target = $region12
    $region11: #{output_block.1} parent=5 // pred_region
      %s111 = ssub.s32 %s8, 1
      // Predicated region
      $region13: #{output_block.1} parent=11 // pred_check
        %p112 = pneg %p69
      $region14: #{output_block.1} parent=11 // pred_check_branch
        %114 = sbr.rel (%p112) target = $region16
      $region15: #{output_block.1} parent=11 // pred_region
        _
      $region16: #{output_block.1} parent=11 // pred_fallthru
        _
    $region12: #{output_block.1} parent=5 // pred_fallthru
      _
    %p115 = scmp.lt.s32.totalorder %s8, 2
    // Predicated region
    $region17: #{output_block.1} parent=5 // pred_check
      %p116 = pneg %p115
    $region18: #{output_block.1} parent=5 // pred_check_branch
      %118 = sbr.rel (%p116) target = $region20
    $region19: #{output_block.1} parent=5 // pred_region
      // Predicated region
      $region21: #{output_block.1} parent=19 // pred_check
        %p119 = pneg %p42
      $region22: #{output_block.1} parent=19 // pred_check_branch
        %121 = sbr.rel (%p119) target = $region24
      $region23: #{output_block.1} parent=19 // pred_region
        %s122 = smul.u32 2, %s16
        %p123 = scmp.lt.s32.totalorder %s15, 1
        %s124 = scalar_select %p123, %s15, 1
        %p125 = scmp.lt.s32.totalorder %s122, 1
        %s126 = scalar_select %p125, %s122, 1
        %s127 = smul.addr %s124, 10
        %s128 = sadd.s32 %s126, %s127
        %s129 = smul.addr %s128, 8
        %s130 = scalar_lea.vmem %s0, %s129
        %s131 = smul.u32 2, %s16
      $region24: #{output_block.1} parent=19 // pred_fallthru
        _
    $region20: #{output_block.1} parent=5 // pred_fallthru
      _
    %p132 = scmp.le.s32.totalorder 1, %s8
    %p133 = scmp.lt.s32.totalorder %s8, 3
    %p134 = pnand %p132, %p133
    %p135 = pneg %p134
    // Predicated region
    $region25: #{output_block.1} parent=5 // pred_check
      _
    $region26: #{output_block.1} parent=5 // pred_check_branch
      %137 = sbr.rel (%p134) target = $region28
    $region27: #{output_block.1} parent=5 // pred_region
      %s138 = ssub.s32 %s8, 1
      %s139 = smul.u32 2, %s18
      %p140 = scmp.lt.s32.totalorder %s17, 1
      %s141 = scalar_select %p140, %s17, 1
      %p142 = scmp.lt.s32.totalorder %s139, 1
      %s143 = scalar_select %p142, %s139, 1
      %s144 = smul.addr %s141, 10
      %s145 = sadd.s32 %s143, %s144
      %s146 = smul.addr %s145, 8
      %s147 = scalar_lea.vmem %s0, %s146
      %p148 = pneg %p48
      %p149 = pneg %p45
      %p150 = pneg %p69
      %p151 = pneg %p66
      %p152 = pneg %p97
      %p153 = pneg %p94
      %s154 = smul.u32 2, %s18
      %p155 = scmp.lt.s32.totalorder %s17, 1
      %s156 = scalar_select %p155, %s17, 1
      %p157 = scmp.lt.s32.totalorder %s154, 1
      %s158 = scalar_select %p157, %s154, 1
      %s159 = smul.addr %s156, 2
      %s160 = sadd.s32 %s158, %s159
      %s161 = smul.addr %s160, 4
      %s162 = scalar_lea.vmem %s2, %s161
      %s163 = smul.u32 2, %s18
      %p164 = scmp.lt.s32.totalorder %s17, 1
      %s165 = scalar_select %p164, %s17, 1
      %p166 = scmp.lt.s32.totalorder %s163, 1
      %s167 = scalar_select %p166, %s163, 1
      %s168 = smul.addr %s165, 10
      %s169 = sadd.s32 %s167, %s168
      %s170 = smul.addr %s169, 8
      %s171 = scalar_lea.vmem %s0, %s170
      %s172 = smul.u32 2, %s18
      %s173 = smul.u32 2, %s18
      %p174 = scmp.lt.s32.totalorder %s17, 1
      %s175 = scalar_select %p174, %s17, 1
      %p176 = scmp.lt.s32.totalorder %s173, 1
      %s177 = scalar_select %p176, %s173, 1
      %s178 = smul.addr %s175, 2
      %s179 = sadd.s32 %s177, %s178
      %s180 = smul.addr %s179, 4
      %s181 = scalar_lea.vmem %s2, %s180
      %s182 = smul.u32 2, %s18
      %v183 = vld [vmem:[%s1] sm:$0xf]
      %v184 = vld [vmem:[%s171] sm:$0xff]
      %v185 = vld [vmem:[%s171 + $0x8] sm:$0xff]
      %v186 = vld [vmem:[%s171 + $0x10] sm:$0xff]
      %v187 = vld [vmem:[%s171 + $0x18] sm:$0xff]
      %v188 = vld [vmem:[%s171 + $0x20] sm:$0xff]
      %v189 = vld [vmem:[%s171 + $0x28] sm:$0xff]
      %v190 = vld [vmem:[%s171 + $0x30] sm:$0xff]
      %v191 = vld [vmem:[%s171 + $0x38] sm:$0xff]
      %v192 = vld [vmem:[%s171 + $0x40] sm:$0xf]
      %v193 = vld [vmem:[%s171 + $0x48] sm:$0xf]
      %vm194 = vcmask 293888
      %v196 = vsel %vm194, %v183, 0
      %vm198 = vcmask 1043456
      %v200 = vsel %vm198, %v192, 0
      %v203 = vsel %vm198, %v193, 0
      %205 = vmatprep.subr.mxu0 %v185
      %206 = vmatpush1.msra.mxu0 %v184
      %207 = vmatprep.subr.mxu0 %v187
      %208 = vmatpush1.msra.mxu0 %v186
      %209 = vmatprep.subr.mxu0 %v189
      %210 = vmatpush1.msra.mxu0 %v188
      %211 = vmatprep.subr.mxu0 %v191
      %212 = vmatpush1.msra.mxu0 %v190
      %213 = vmatprep.subr.mxu0 %v203
      %214 = vmatpush1.msra.mxu0 %v200
      %215 = vmatprep.subr.mxu0 0.0
      %216 = vmatpush1.msra.mxu0 0.0
      %217 = vmatprep.subr.mxu0 0.0
      %218 = vmatpush1.msra.mxu0 0.0
      %219 = vmatprep.subr.mxu0 0.0
      %220 = vmatpush1.msra.mxu0 0.0
      %221 = vmatprep.subr.mxu0 0.0
      %222 = vmatpush1.msra.mxu0 0.0
      %223 = vmatprep.subr.mxu0 0.0
      %224 = vmatpush1.msra.mxu0 0.0
      %225 = vmatprep.subr.mxu0 0.0
      %226 = vmatpush1.msra.mxu0 0.0
      %227 = vmatprep.subr.mxu0 0.0
      %228 = vmatpush1.msra.mxu0 0.0
      %229 = vmatprep.subr.mxu0 0.0
      %230 = vmatpush1.msra.mxu0 0.0
      %231 = vmatprep.subr.mxu0 0.0
      %232 = vmatpush1.msra.mxu0 0.0
      %233 = vmatprep.subr.mxu0 0.0
      %234 = vmatpush1.msra.mxu0 0.0
      %235 = vmatprep.subr.mxu0 0.0
      %236 = vmatpush1.msra.mxu0 0.0
      %237 = vmatprep.subr.mxu0 0.0
      %238 = vmatpush1.msra.mxu0 0.0
      %239 = vmatprep.subr.mxu0 0.0
      %240 = vmatpush1.msra.mxu0 0.0
      %241 = vmatprep.subr.mxu0 0.0
      %242 = vmatpush1.msra.mxu0 0.0
      %243 = vmatprep.subr.mxu0 0.0
      %244 = vmatpush1.msra.mxu0 0.0
      %245 = vmatprep.subr.mxu0 0.0
      %246 = vmatpush1.msra.mxu0 0.0
      %247 = vmatprep.subr.mxu0 0.0
      %248 = vmatpush1.msra.mxu0 0.0
      %249 = vmatprep.subr.mxu0 0.0
      %250 = vmatpush1.msra.mxu0 0.0
      %251 = vmatprep.subr.mxu0 0.0
      %252 = vmatpush1.msra.mxu0 0.0
      %253 = vmatprep.subr.mxu0 0.0
      %254 = vmatpush1.msra.mxu0 0.0
      %255 = vmatprep.subr.mxu0 0.0
      %256 = vmatpush1.msra.mxu0 0.0
      %257 = vmatprep.subr.mxu0 0.0
      %258 = vmatpush1.msra.mxu0 0.0
      %259 = vmatprep.subr.mxu0 0.0
      %260 = vmatpush1.msra.mxu0 0.0
      %261 = vmatprep.subr.mxu0 0.0
      %262 = vmatpush1.msra.mxu0 0.0
      %263 = vmatprep.subr.mxu0 0.0
      %264 = vmatpush1.msra.mxu0 0.0
      %265 = vmatprep.subr.mxu0 0.0
      %266 = vmatpush1.msra.mxu0 0.0
      %267 = vmatprep.subr.mxu0 0.0
      %268 = vmatpush1.msra.mxu0 0.0
      %269 = vmatprep.mubr.f32.mxu0 0.0
      %270 = vmatmul.mubr.f32.gmra.mrb[0].mxu0 %v196
      %v271 = vpop.f32.mrb[0].mxu0
      %v272 = vadd.f32 0.0, %v271
      %v273 = vpop.f32.mrb[0].mxu0
      %v274 = vadd.f32 0.0, %v273
      %275 = vdwg.mxu0
      %v276 = vmax.f32 %v272, 0.0
      %v277 = vmax.f32 %v274, 0.0
      %v280 = vcombine.low %v276, %v277
      %282 = vst [vmem:[%s181] sm:$0xff] %v280
      %s283 = smul.u32 2, %s18
      %p284 = scmp.lt.s32.totalorder %s17, 1
      %s285 = scalar_select %p284, %s17, 1
      %p286 = scmp.lt.s32.totalorder %s283, 1
      %s287 = scalar_select %p286, %s283, 1
      %s288 = smul.addr %s285, 2
      %s289 = sadd.s32 %s287, %s288
      %s290 = smul.addr %s289, 4
      %s291 = scalar_lea.vmem %s2, %s290
      // Predicated region
      $region29: #{output_block.1} parent=27 // pred_check
        %p292 = pneg %p94
      $region30: #{output_block.1} parent=27 // pred_check_branch
        %294 = sbr.rel (%p292) target = $region32
      $region31: #{output_block.1} parent=27 // pred_region
        %s295 = smul.u32 2, %s18
      $region32: #{output_block.1} parent=27 // pred_fallthru
        _
    $region28: #{output_block.1} parent=5 // pred_fallthru
      _
    %p296 = scmp.le.s32.totalorder 2, %s8
    // Predicated region
    $region33: #{output_block.1} parent=5 // pred_check
      %p297 = pneg %p296
    $region34: #{output_block.1} parent=5 // pred_check_branch
      %299 = sbr.rel (%p297) target = $region36
    $region35: #{output_block.1} parent=5 // pred_region
      %s300 = ssub.s32 %s8, 2
      // Predicated region
      $region37: #{output_block.1} parent=35 // pred_check
        %p301 = pneg %p100
      $region38: #{output_block.1} parent=35 // pred_check_branch
        %303 = sbr.rel (%p301) target = $region40
      $region39: #{output_block.1} parent=35 // pred_region
        %s304 = smul.u32 2, %s20
        %p305 = scmp.lt.s32.totalorder %s19, 1
        %s306 = scalar_select %p305, %s19, 1
        %p307 = scmp.lt.s32.totalorder %s304, 1
        %s308 = scalar_select %p307, %s304, 1
        %s309 = smul.addr %s306, 2
        %s310 = sadd.s32 %s308, %s309
        %s311 = smul.addr %s310, 4
        %s312 = scalar_lea.vmem %s2, %s311
      $region40: #{output_block.1} parent=35 // pred_fallthru
        _
    $region36: #{output_block.1} parent=5 // pred_fallthru
      _
  $region6: #{output_block.1} parent=0 // loop_footer
    %s12 = sadd.s32 1, %s8
  $region7: #{output_block.1} parent=0 // loop_footer_branch
    %7 = sbr.rel target = $region3
  $region8: #{output_block.1} parent=0 // loop_exit
    _

</llo_original>
